<compile_context>
chip_gen: v7x
topology: tpu7x:2x2x1
jax: 0.10.0
libtpu: 0.0.40
codegen_flags: <defaults>
</compile_context>

<pallas_src>
import jax
import jax.numpy as jnp
from jax import lax
from jax.experimental import pallas as pl
from jax.experimental.pallas import tpu as pltpu


def _round_up(x, m):
    return (x + m - 1) // m * m


# --------------------------------------------------------------------------
# Kernel 1: hidden = x @ W1^T + b1   (K = vocab-in, tiled + accumulated)
# --------------------------------------------------------------------------
def _hidden_kernel(x_ref, w1_ref, b1_ref, h_ref, acc_ref):
    k = pl.program_id(1)

    @pl.when(k == 0)
    def _init():
        acc_ref[...] = jnp.zeros_like(acc_ref)

    # (tm, tk) x (E, tk) contracted on the vocab axis -> (tm, E).
    # PyTorch-layout W1 (E, V) is used directly; no wrapper-side transpose.
    acc_ref[...] += lax.dot_general(
        x_ref[...], w1_ref[...],
        dimension_numbers=(((1,), (1,)), ((), ())),
        preferred_element_type=jnp.float32)

    @pl.when(k == pl.num_programs(1) - 1)
    def _finalize():
        h_ref[...] = (acc_ref[...] + b1_ref[...]).astype(h_ref.dtype)


# --------------------------------------------------------------------------
# Kernel 2: out = hidden @ W2^T   (N = vocab-out, tiled)
# --------------------------------------------------------------------------
def _output_kernel(h_ref, w2_ref, o_ref):
    # (tm, E) x (tn, E) contracted on the embed axis -> (tm, tn).
    # PyTorch-layout W2 (V, E) used directly.
    o_ref[...] = lax.dot_general(
        h_ref[...], w2_ref[...],
        dimension_numbers=(((1,), (1,)), ((), ())),
        preferred_element_type=jnp.float32).astype(o_ref.dtype)


# --------------------------------------------------------------------------
# Wrapper
# --------------------------------------------------------------------------
def w2v_forward(x, w1, b1, w2, *, batch_tile=128, vocab_tile=512,
                vmem_limit_bytes=48 * 1024 * 1024):
    """Forward of W2V_Model.

    x : (B, V)   activations (float32 or bfloat16)
    w1: (E, V)   linear1.weight  (PyTorch layout)
    b1: (E,)     linear1.bias
    w2: (V, E)   linear2.weight  (PyTorch layout)
    returns (B, V) in x.dtype
    """
    B, V = x.shape
    E, Vw = w1.shape
    assert Vw == V and w2.shape == (V, E) and b1.shape == (E,)

    # ---- tile selection ---------------------------------------------------
    # Batch tile: 128 rows keeps the MXU fed; for tiny batches use a single
    # 8-aligned step instead of padding 16x with zero rows.
    tm = batch_tile if B >= batch_tile else _round_up(B, 8)
    # Vocab tiles must be lane-aligned (multiple of 128) unless they cover V.
    if V % 128 == 0:
        tk = min(vocab_tile, V)   # vocab-in  (reduction) tile, kernel 1
        tn = min(vocab_tile, V)   # vocab-out (output)    tile, kernel 2
    else:
        tk = tn = V               # small / odd V: keep vocab untiled
    assert V % tk == 0 and V % tn == 0, "vocab_size must be divisible by tile"

    # Pad batch to a multiple of the batch tile (sliced back at the end).
    Bp = _round_up(B, tm)
    if Bp != B:
        x = jnp.pad(x, ((0, Bp - B), (0, 0)))

    b1r = b1.reshape(1, E)  # broadcast over batch rows inside the kernel

    num_m = Bp // tm
    num_k = V // tk
    num_n = V // tn

    cparams_k1 = pltpu.CompilerParams(
        dimension_semantics=("parallel", "arbitrary"),
        vmem_limit_bytes=vmem_limit_bytes)
    cparams_k2 = pltpu.CompilerParams(
        dimension_semantics=("parallel", "parallel"),
        vmem_limit_bytes=vmem_limit_bytes)

    # ---- kernel 1: h = x @ W1^T + b1 --------------------------------------
    h = pl.pallas_call(
        _hidden_kernel,
        out_shape=jax.ShapeDtypeStruct((Bp, E), x.dtype),
        grid_spec=pltpu.PrefetchScalarGridSpec(
            num_scalar_prefetch=0,
            grid=(num_m, num_k),
            in_specs=[
                pl.BlockSpec((tm, tk), lambda i, k: (i, k)),   # x tile
                pl.BlockSpec((E, tk), lambda i, k: (0, k)),    # W1 tile (E, tk)
                pl.BlockSpec((1, E), lambda i, k: (0, 0)),     # bias
            ],
            out_specs=pl.BlockSpec((tm, E), lambda i, k: (i, 0)),
            scratch_shapes=[pltpu.VMEM((tm, E), jnp.float32)],  # f32 accumulator
        ),
        compiler_params=cparams_k1,
    )(x, w1, b1r)

    # ---- kernel 2: out = h @ W2^T ------------------------------------------
    # Grid order (vocab-out, batch): each W2 tile is streamed through VMEM
    # exactly once; only the tiny (tm, E) h tile is re-fetched.  Both axes are
    # independent -> "parallel" (both v7x TensorCores get work).
    out = pl.pallas_call(
        _output_kernel,
        out_shape=jax.ShapeDtypeStruct((Bp, V), x.dtype),
        grid_spec=pltpu.PrefetchScalarGridSpec(
            num_scalar_prefetch=0,
            grid=(num_n, num_m),
            in_specs=[
                pl.BlockSpec((tm, E), lambda n, m: (m, 0)),    # hidden tile
                pl.BlockSpec((tn, E), lambda n, m: (n, 0)),    # W2 tile (tn, E)
            ],
            out_specs=pl.BlockSpec((tm, tn), lambda n, m: (m, n)),
        ),
        compiler_params=cparams_k2,
    )(h, w2)

    if Bp != B:
        out = out[:B]
    return out


def w2v_reference(x, w1, b1, w2):
    h = x @ w1.T + b1
    return h @ w2.T


if __name__ == "__main__":
    vocab_size = 512
    embed_size = 128
    batch = 256

    key = jax.random.PRNGKey(0)
    kx, kw1, kb1, kw2 = jax.random.split(key, 4)

    # Deterministic synthetic parameters (PyTorch Linear shapes).
    x = jax.random.normal(kx, (batch, vocab_size), dtype=jnp.float32)
    w1 = jax.random.normal(kw1, (embed_size, vocab_size), dtype=jnp.float32) * 0.02
    b1 = jax.random.normal(kb1, (embed_size,), dtype=jnp.float32) * 0.02
    w2 = jax.random.normal(kw2, (vocab_size, embed_size), dtype=jnp.float32) * 0.02

    ref = w2v_reference(x, w1, b1, w2)

    # f32 run (exercises batch + vocab-in + vocab-out tiling).
    out = w2v_forward(x, w1, b1, w2, vocab_tile=256)
    out = jax.block_until_ready(out)
    assert out.shape == (batch, vocab_size)
    assert jnp.allclose(out, ref, atol=1e-4, rtol=1e-4)

    # bf16 operands (v6e/v7x MXU fast path); accumulation stays in f32.
    out_bf16 = w2v_forward(x.astype(jnp.bfloat16),
                           w1.astype(jnp.bfloat16),
                           b1.astype(jnp.bfloat16),
                           w2.astype(jnp.bfloat16))
    out_bf16 = jax.block_until_ready(out_bf16)
    assert jnp.allclose(out_bf16.astype(jnp.float32), ref, atol=2e-2, rtol=2e-2)

    print("KERNEL_OK")
</pallas_src>

<mosaic_0001>
module attributes {stable_mosaic.version = 11 : i64} {
  func.func @_hidden_kernel(%arg0: i32, %arg1: i32, %arg2: memref<128x256xf32, #tpu.memory_space<vmem>>, %arg3: memref<128x256xf32, #tpu.memory_space<vmem>>, %arg4: memref<1x128xf32, #tpu.memory_space<vmem>>, %arg5: memref<128x128xf32, #tpu.memory_space<vmem>>, %arg6: memref<128x128xf32, #tpu.memory_space<vmem>>) attributes {dimension_semantics = [#tpu.dimension_semantics<parallel>, #tpu.dimension_semantics<arbitrary>], iteration_bounds = array<i64: 2, 2>, scalar_prefetch = 0 : i64, scratch_operands = 1 : i64, tpu.core_type = #tpu.core_type<tc>, window_params = [{transform_indices = @transform_0, window_bounds = array<i64: 128, 256>}, {transform_indices = @transform_1, window_bounds = array<i64: 128, 256>}, {pipeline_mode = #tpu.pipeline_mode<synchronous>, transform_indices = @transform_2, window_bounds = array<i64: 1, 128>}, {transform_indices = @transform_3, window_bounds = array<i64: 128, 128>}]} {
    %c0_i32 = arith.constant 0 : i32
    %0 = arith.cmpi eq, %arg1, %c0_i32 : i32
    %1 = arith.extui %0 : i1 to i32
    %c0_i32_0 = arith.constant 0 : i32
    %2 = arith.cmpi ne, %1, %c0_i32_0 : i32
    scf.if %2 {
      %cst_9 = arith.constant 0.000000e+00 : f32
      %12 = vector.broadcast %cst_9 : f32 to vector<128x128xf32>
      %c0_10 = arith.constant 0 : index
      %c0_11 = arith.constant 0 : index
      %13 = vector.load %arg6[%c0_10, %c0_11] : memref<128x128xf32, #tpu.memory_space<vmem>>, vector<128x128xf32>
      tpu.vector_store %arg6[%c0_10, %c0_11], %12 {strides = array<i32>} : memref<128x128xf32, #tpu.memory_space<vmem>>, vector<128x128xf32>,
    } else {
    }
    %c0 = arith.constant 0 : index
    %c0_1 = arith.constant 0 : index
    %3 = vector.load %arg6[%c0, %c0_1] : memref<128x128xf32, #tpu.memory_space<vmem>>, vector<128x128xf32>
    %c0_2 = arith.constant 0 : index
    %c0_3 = arith.constant 0 : index
    %4 = vector.load %arg2[%c0_2, %c0_3] : memref<128x256xf32, #tpu.memory_space<vmem>>, vector<128x256xf32>
    %c0_4 = arith.constant 0 : index
    %c0_5 = arith.constant 0 : index
    %5 = vector.load %arg3[%c0_4, %c0_5] : memref<128x256xf32, #tpu.memory_space<vmem>>, vector<128x256xf32>
    %cst = arith.constant dense<0.000000e+00> : vector<128x128xf32>
    %6 = tpu.matmul %4, %5, %cst {dimension_numbers = #tpu.dot_dimension_numbers<[1], [1], [0], [0], [0, 0, 1, 0], [], []>} : vector<128x256xf32>, vector<128x256xf32>, vector<128x128xf32> -> vector<128x128xf32>
    %7 = arith.addf %3, %6 : vector<128x128xf32>
    %c0_6 = arith.constant 0 : index
    %c0_7 = arith.constant 0 : index
    %8 = vector.load %arg6[%c0_6, %c0_7] : memref<128x128xf32, #tpu.memory_space<vmem>>, vector<128x128xf32>
    tpu.vector_store %arg6[%c0_6, %c0_7], %7 {strides = array<i32>} : memref<128x128xf32, #tpu.memory_space<vmem>>, vector<128x128xf32>,
    %c1_i32 = arith.constant 1 : i32
    %9 = arith.cmpi eq, %arg1, %c1_i32 : i32
    %10 = arith.extui %9 : i1 to i32
    %c0_i32_8 = arith.constant 0 : i32
    %11 = arith.cmpi ne, %10, %c0_i32_8 : i32
    scf.if %11 {
      %c0_9 = arith.constant 0 : index
      %c0_10 = arith.constant 0 : index
      %12 = vector.load %arg6[%c0_9, %c0_10] : memref<128x128xf32, #tpu.memory_space<vmem>>, vector<128x128xf32>
      %c0_11 = arith.constant 0 : index
      %c0_12 = arith.constant 0 : index
      %13 = vector.load %arg4[%c0_11, %c0_12] : memref<1x128xf32, #tpu.memory_space<vmem>>, vector<1x128xf32>
      %14 = vector.broadcast %13 : vector<1x128xf32> to vector<128x128xf32>
      %15 = arith.addf %12, %14 : vector<128x128xf32>
      %c0_13 = arith.constant 0 : index
      %c0_14 = arith.constant 0 : index
      %16 = vector.load %arg5[%c0_13, %c0_14] : memref<128x128xf32, #tpu.memory_space<vmem>>, vector<128x128xf32>
      tpu.vector_store %arg5[%c0_13, %c0_14], %15 {strides = array<i32>} : memref<128x128xf32, #tpu.memory_space<vmem>>, vector<128x128xf32>,
    } else {
    }
    return
  }
  func.func @transform_0(%arg0: i32, %arg1: i32) -> (i32, i32) {
    %c0_i32 = arith.constant 0 : i32
    return %arg0, %arg1 : i32, i32
  }
  func.func @transform_1(%arg0: i32, %arg1: i32) -> (i32, i32) {
    %c0_i32 = arith.constant 0 : i32
    %c0_i32_0 = arith.constant 0 : i32
    return %c0_i32, %arg1 : i32, i32
  }
  func.func @transform_2(%arg0: i32, %arg1: i32) -> (i32, i32) {
    %c0_i32 = arith.constant 0 : i32
    %c0_i32_0 = arith.constant 0 : i32
    %c0_i32_1 = arith.constant 0 : i32
    return %c0_i32, %c0_i32_0 : i32, i32
  }
  func.func @transform_3(%arg0: i32, %arg1: i32) -> (i32, i32) {
    %c0_i32 = arith.constant 0 : i32
    %c0_i32_0 = arith.constant 0 : i32
    return %arg0, %c0_i32 : i32, i32
  }
}

</mosaic_0001>

<llo_original>
// kernel: tpu_custom_call.1
$region0: #{tpu_custom_call.1}
  #allocation0 [shape = 'u32[]', space=smem, size = 0x4, offset = 0x4, fixed_abs, tag = 'smem constant byte address 0x4 - core index']
  #allocation1 [shape = 'u32[144,128]{1,0:T(1,128)}', space=vmem, size = 0x12000, scoped, tag = 'internal scratch']
  #allocation2 [shape = 'f32[128,128]{1,0:T(8,128)}', space=vmem, size = 0x10000, scoped, tag = 'scratch operand']
  %s0 = inlined_call_operand.hbm [shape: f32[256,512], index: 0, kind: input, shape index: {}]
  %s1 = inlined_call_operand.hbm [shape: f32[128,512], index: 1, kind: input, shape index: {}]
  %s2 = inlined_call_operand.vmem [shape: f32[1,128], index: 2, kind: input, shape index: {}]
  %s3 = inlined_call_operand.hbm [shape: f32[256,128], index: 3, kind: output, shape index: {}]
  %s4 = sld [smem:[#allocation0]]
  $region61: #{tpu_custom_call.1} parent=0
    _
  %s6 = ssub.s32 1, %s4
  %s7 = scalar_select 0, %s6, %s4
  $region1: #{tpu_custom_call.1} parent=0
    #allocation3 [shape = 'u8[262144]{0}', space=vmem, size = 0x40000, scoped, tag = 'input window, operand 0']
    #allocation4 [shape = 's32[2]{0}', space=sflag, size = 0x8, scoped, tag = 'scoped memory for tpu_custom_call.1']
    #allocation5 [shape = 's32[2]{0}', space=sflag, size = 0x8, scoped, tag = 'scoped memory for tpu_custom_call.1']
    #allocation6 [shape = 'u8[262144]{0}', space=vmem, size = 0x40000, scoped, tag = 'input window, operand 1']
    #allocation7 [shape = 's32[2]{0}', space=sflag, size = 0x8, scoped, tag = 'scoped memory for tpu_custom_call.1']
    #allocation8 [shape = 'u8[131072]{0}', space=vmem, size = 0x20000, scoped, tag = 'output window, operand 0']
    %8 = vsyncpa [#allocation4], 0
    %s9 = scalar_lea.sflag [#allocation4], 1
    %10 = vsyncpa %s9, 0
    %11 = vsyncpa [#allocation7], 0
    %s12 = scalar_lea.sflag [#allocation7], 1
    %13 = vsyncpa %s12, 0
    %14 = vsyncpa [#allocation5], 0
    %s15 = scalar_lea.sflag [#allocation5], 1
    %16 = vsyncpa %s15, 0
    loop: start=0, step=1, limit=6
    $region2: #{tpu_custom_call.1} parent=1 // loop_pre_header
      _
    $region3: #{tpu_custom_call.1} parent=1 // loop_header
      %s18 = sphi 0, %s22
      %p19 = scmp.ge.s32.totalorder %s18, 6
      %s25 = sphi 0, %s37
      %s26 = sphi 0, %s33
      %s27 = sphi 0, %s25
      %s28 = sphi 0, %s26
      %s29 = sphi 0, %s27
      %s30 = sphi 0, %s28
      %s42 = sphi 0, %s44
      %s45 = sphi 0, %s42
      %s46 = sphi 0, %s45
      %s62 = sphi 0, %s46
      %s68 = sphi 0, %s70
      %s71 = sphi 0, %s68
      %s72 = sphi 0, %s71
      %s88 = sphi 0, %s72
      %s92 = sphi 0, %s92
      %s94 = sphi 0, %s92
      %s95 = sphi 0, %s94
      %s109 = sphi 0, %s95
      %s115 = sphi 0, %s117
      %s118 = sphi 0, %s115
      %s119 = sphi 0, %s118
      %s135 = sphi 0, %s119
    $region4: #{tpu_custom_call.1} parent=1 // loop_header_branch
      %21 = sbr.rel (%p19) target = $region8
    $region5: #{tpu_custom_call.1} parent=1 // loop_body
      %s23 = ssub.s32 %s18, 1
      %s24 = ssub.s32 %s18, 2
      %s31 = sadd.s32 1, %s26
      %p32 = scmp.ge.s32.totalorder %s31, 2
      %s33 = scalar_select %p32, 0, %s31
      %s34 = sadd.s32 1, %s25
      %s35 = scalar_select %p32, %s34, %s25
      %p36 = scmp.ge.s32.totalorder %s35, 2
      %s37 = scalar_select %p36, 0, %s35
      %s38 = ssub.s32 %s25, %s37
      %s39 = ssub.s32 %s26, %s33
      %s40 = sor.u32 %s38, %s39
      %p41 = scmp.eq.s32.totalorder %s40, 0
      %s43 = sadd.s32 %s42, 1
      %s44 = scalar_select %p41, %s42, %s43
      %p47 = pneg %p41
      %p48 = scmp.eq.s32.totalorder %s18, 3
      %p49 = por %p47, %p48
      %p50 = scmp.ne.s32.totalorder %s42, %s45
      %p51 = scmp.eq.s32.totalorder %s18, 0
      %p52 = por %p50, %p51
      %p53 = scmp.ne.s32.totalorder %s42, %s45
      %p54 = scmp.eq.s32.totalorder %s23, 3
      %p55 = por %p53, %p54
      %p56 = scmp.ne.s32.totalorder %s45, %s46
      %p57 = scmp.eq.s32.totalorder %s23, 0
      %p58 = por %p56, %p57
      %p59 = scmp.ne.s32.totalorder %s45, %s46
      %p60 = scmp.eq.s32.totalorder %s24, 3
      %p61 = por %p59, %p60
      %p63 = scmp.ne.s32.totalorder %s46, %s62
      %p64 = scmp.eq.s32.totalorder %s24, 0
      %p65 = por %p63, %p64
      %s66 = ssub.s32 %s26, %s33
      %p67 = scmp.eq.s32.totalorder %s66, 0
      %s69 = sadd.s32 %s68, 1
      %s70 = scalar_select %p67, %s68, %s69
      %p73 = pneg %p67
      %p74 = scmp.eq.s32.totalorder %s18, 3
      %p75 = por %p73, %p74
      %p76 = scmp.ne.s32.totalorder %s68, %s71
      %p77 = scmp.eq.s32.totalorder %s18, 0
      %p78 = por %p76, %p77
      %p79 = scmp.ne.s32.totalorder %s68, %s71
      %p80 = scmp.eq.s32.totalorder %s23, 3
      %p81 = por %p79, %p80
      %p82 = scmp.ne.s32.totalorder %s71, %s72
      %p83 = scmp.eq.s32.totalorder %s23, 0
      %p84 = por %p82, %p83
      %p85 = scmp.ne.s32.totalorder %s71, %s72
      %p86 = scmp.eq.s32.totalorder %s24, 3
      %p87 = por %p85, %p86
      %p89 = scmp.ne.s32.totalorder %s72, %s88
      %p90 = scmp.eq.s32.totalorder %s24, 0
      %p91 = por %p89, %p90
      %s93 = sadd.s32 %s92, 1
      %p96 = scmp.eq.s32.totalorder %s18, 3
      %p97 = scmp.ne.s32.totalorder %s92, %s94
      %p98 = scmp.eq.s32.totalorder %s18, 0
      %p99 = por %p97, %p98
      %p100 = scmp.ne.s32.totalorder %s92, %s94
      %p101 = scmp.eq.s32.totalorder %s23, 3
      %p102 = por %p100, %p101
      %p103 = scmp.ne.s32.totalorder %s94, %s95
      %p104 = scmp.eq.s32.totalorder %s23, 0
      %p105 = por %p103, %p104
      %p106 = scmp.ne.s32.totalorder %s94, %s95
      %p107 = scmp.eq.s32.totalorder %s24, 3
      %p108 = por %p106, %p107
      %p110 = scmp.ne.s32.totalorder %s95, %s109
      %p111 = scmp.eq.s32.totalorder %s24, 0
      %p112 = por %p110, %p111
      %s113 = ssub.s32 %s25, %s37
      %p114 = scmp.eq.s32.totalorder %s113, 0
      %s116 = sadd.s32 %s115, 1
      %s117 = scalar_select %p114, %s115, %s116
      %p120 = pneg %p114
      %p121 = scmp.eq.s32.totalorder %s18, 3
      %p122 = por %p120, %p121
      %p123 = scmp.ne.s32.totalorder %s115, %s118
      %p124 = scmp.eq.s32.totalorder %s18, 0
      %p125 = por %p123, %p124
      %p126 = scmp.ne.s32.totalorder %s115, %s118
      %p127 = scmp.eq.s32.totalorder %s23, 3
      %p128 = por %p126, %p127
      %p129 = scmp.ne.s32.totalorder %s118, %s119
      %p130 = scmp.eq.s32.totalorder %s23, 0
      %p131 = por %p129, %p130
      %p132 = scmp.ne.s32.totalorder %s118, %s119
      %p133 = scmp.eq.s32.totalorder %s24, 3
      %p134 = por %p132, %p133
      %p136 = scmp.ne.s32.totalorder %s119, %s135
      %p137 = scmp.eq.s32.totalorder %s24, 0
      %p138 = por %p136, %p137
      %p139 = scmp.le.s32.totalorder 1, %s18
      %p140 = scmp.lt.s32.totalorder %s18, 5
      %p141 = pnand %p139, %p140
      %p142 = pneg %p141
      // Predicated region
      $region9: #{tpu_custom_call.1} parent=5 // pred_check
        _
      $region10: #{tpu_custom_call.1} parent=5 // pred_check_branch
        %144 = sbr.rel (%p141) target = $region12
      $region11: #{tpu_custom_call.1} parent=5 // pred_region
        %s145 = ssub.s32 %s18, 1
        // Predicated region
        $region13: #{tpu_custom_call.1} parent=11 // pred_check
          %p146 = pneg %p105
        $region14: #{tpu_custom_call.1} parent=11 // pred_check_branch
          %148 = sbr.rel (%p146) target = $region16
        $region15: #{tpu_custom_call.1} parent=11 // pred_region
          _
        $region16: #{tpu_custom_call.1} parent=11 // pred_fallthru
          _
      $region12: #{tpu_custom_call.1} parent=5 // pred_fallthru
        _
      %p149 = scmp.lt.s32.totalorder %s18, 4
      // Predicated region
      $region17: #{tpu_custom_call.1} parent=5 // pred_check
        %p150 = pneg %p149
      $region18: #{tpu_custom_call.1} parent=5 // pred_check_branch
        %152 = sbr.rel (%p150) target = $region20
      $region19: #{tpu_custom_call.1} parent=5 // pred_region
        // Predicated region
        $region21: #{tpu_custom_call.1} parent=19 // pred_check
          %p153 = pneg %p52
        $region22: #{tpu_custom_call.1} parent=19 // pred_check_branch
          %155 = sbr.rel (%p153) target = $region24
        $region23: #{tpu_custom_call.1} parent=19 // pred_region
          %s156 = sand.u32 %s42, 1
          %s157 = scalar_lea.sflag [#allocation4], %s156
          %s158 = sand.u32 %s42, 1
          %s159 = smul.addr %s158, 256
          %s160 = scalar_lea.vmem [#allocation3], %s159
          %s161 = smul.u32 16, %s25
          %s162 = smul.u32 2, %s26
          %s164 = ssub.s32 4096, 4096
          %165 = vsyncadd %s157, %s164
          %s166 = smul.addr %s161, 4
          %s167 = sadd.s32 %s162, %s166
          %s168 = smul.addr %s167, 128
          %s169 = scalar_lea.hbm %s0, %s168
          %s170 = sshll.u32 %s160, 4
          %s171 = int_to_ptr.vmem [resolvable:$true] %s170
          %176 = dma.hbm_to_vmem [thread:$0]  %s169, 4096, %s171, %s157, 512, 256, 16
        $region24: #{tpu_custom_call.1} parent=19 // pred_fallthru
          _
        // Predicated region
        $region25: #{tpu_custom_call.1} parent=19 // pred_check
          %p177 = pneg %p78
        $region26: #{tpu_custom_call.1} parent=19 // pred_check_branch
          %179 = sbr.rel (%p177) target = $region28
        $region27: #{tpu_custom_call.1} parent=19 // pred_region
          %s180 = sand.u32 %s68, 1
          %s181 = scalar_lea.sflag [#allocation7], %s180
          %s182 = sand.u32 %s68, 1
          %s183 = smul.addr %s182, 256
          %s184 = scalar_lea.vmem [#allocation6], %s183
          %s185 = smul.u32 2, %s26
          %s187 = ssub.s32 4096, 4096
          %188 = vsyncadd %s181, %s187
          %s189 = smul.addr %s185, 128
          %s190 = scalar_lea.hbm %s1, %s189
          %s191 = sshll.u32 %s184, 4
          %s192 = int_to_ptr.vmem [resolvable:$true] %s191
          %197 = dma.hbm_to_vmem [thread:$0]  %s190, 4096, %s192, %s181, 512, 256, 16
        $region28: #{tpu_custom_call.1} parent=19 // pred_fallthru
          _
      $region20: #{tpu_custom_call.1} parent=5 // pred_fallthru
        _
      %p198 = scmp.le.s32.totalorder 1, %s18
      %p199 = scmp.lt.s32.totalorder %s18, 5
      %p200 = pnand %p198, %p199
      %p201 = pneg %p200
      // Predicated region
      $region29: #{tpu_custom_call.1} parent=5 // pred_check
        _
      $region30: #{tpu_custom_call.1} parent=5 // pred_check_branch
        %203 = sbr.rel (%p200) target = $region32
      $region31: #{tpu_custom_call.1} parent=5 // pred_region
        %s204 = ssub.s32 %s18, 1
        %s205 = sand.u32 %s45, 1
        %s206 = scalar_lea.sflag [#allocation4], %s205
        %s207 = sand.u32 %s45, 1
        %s208 = smul.addr %s207, 256
        %s209 = scalar_lea.vmem [#allocation3], %s208
        // Predicated region
        $region33: #{tpu_custom_call.1} parent=31 // pred_check
          %p210 = pneg %p58
        $region34: #{tpu_custom_call.1} parent=31 // pred_check_branch
          %212 = sbr.rel (%p210) target = $region36
        $region35: #{tpu_custom_call.1} parent=31 // pred_region
          %213 = dma.done %s206, 4096
        $region36: #{tpu_custom_call.1} parent=31 // pred_fallthru
          _
        %s214 = sand.u32 %s71, 1
        %s215 = scalar_lea.sflag [#allocation7], %s214
        %s216 = sand.u32 %s71, 1
        %s217 = smul.addr %s216, 256
        %s218 = scalar_lea.vmem [#allocation6], %s217
        // Predicated region
        $region37: #{tpu_custom_call.1} parent=31 // pred_check
          %p219 = pneg %p84
        $region38: #{tpu_custom_call.1} parent=31 // pred_check_branch
          %221 = sbr.rel (%p219) target = $region40
        $region39: #{tpu_custom_call.1} parent=31 // pred_region
          %222 = dma.done %s215, 4096
        $region40: #{tpu_custom_call.1} parent=31 // pred_fallthru
          _
        %s223 = sand.u32 %s45, 1
        %s224 = scalar_lea.sflag [#allocation4], %s223
        %s225 = sand.u32 %s45, 1
        %s226 = smul.addr %s225, 256
        %s227 = scalar_lea.vmem [#allocation3], %s226
        %p228 = pneg %p58
        %p229 = pneg %p55
        %s230 = sand.u32 %s71, 1
        %s231 = scalar_lea.sflag [#allocation7], %s230
        %s232 = sand.u32 %s71, 1
        %s233 = smul.addr %s232, 256
        %s234 = scalar_lea.vmem [#allocation6], %s233
        %p235 = pneg %p84
        %p236 = pneg %p81
        %p237 = pneg %p105
        %p238 = pneg %p102
        %p239 = pneg %p131
        %p240 = pneg %p128
        %s241 = sand.u32 %s118, 1
        %s242 = scalar_lea.sflag [#allocation5], %s241
        %s243 = sand.u32 %s118, 1
        %s244 = smul.addr %s243, 128
        %s245 = scalar_lea.vmem [#allocation8], %s244
        %s246 = smul.u32 16, %s27
        %s247 = smul.u32 2, %s28
        %s248 = smul.u32 2, %s28
        %s249 = smul.u32 16, %s27
        %p250 = scmp.eq.s32.totalorder %s28, 0
        // Predicated region
        $region41: #{tpu_custom_call.1} parent=31 // pred_check
          %p251 = pneg %p250
        $region42: #{tpu_custom_call.1} parent=31 // pred_check_branch
          %253 = sbr.rel (%p251) target = $region44
        $region43: #{tpu_custom_call.1} parent=31 // pred_region
          %254 = vst [vmem:[#allocation2] sm:$0xff] 0.0
          %255 = vst [vmem:[#allocation2 + $0x8] sm:$0xff] 0.0
          %256 = vst [vmem:[#allocation2 + $0x10] sm:$0xff] 0.0
          %257 = vst [vmem:[#allocation2 + $0x18] sm:$0xff] 0.0
          %258 = vst [vmem:[#allocation2 + $0x20] sm:$0xff] 0.0
          %259 = vst [vmem:[#allocation2 + $0x28] sm:$0xff] 0.0
          %260 = vst [vmem:[#allocation2 + $0x30] sm:$0xff] 0.0
          %261 = vst [vmem:[#allocation2 + $0x38] sm:$0xff] 0.0
          %262 = vst [vmem:[#allocation2 + $0x40] sm:$0xff] 0.0
          %263 = vst [vmem:[#allocation2 + $0x48] sm:$0xff] 0.0
          %264 = vst [vmem:[#allocation2 + $0x50] sm:$0xff] 0.0
          %265 = vst [vmem:[#allocation2 + $0x58] sm:$0xff] 0.0
          %266 = vst [vmem:[#allocation2 + $0x60] sm:$0xff] 0.0
          %267 = vst [vmem:[#allocation2 + $0x68] sm:$0xff] 0.0
          %268 = vst [vmem:[#allocation2 + $0x70] sm:$0xff] 0.0
          %269 = vst [vmem:[#allocation2 + $0x78] sm:$0xff] 0.0
        $region44: #{tpu_custom_call.1} parent=31 // pred_fallthru
          _
        %v270 = vld [vmem:[#allocation2] sm:$0xff]
        %v271 = vld [vmem:[#allocation2 + $0x8] sm:$0xff]
        %v272 = vld [vmem:[#allocation2 + $0x10] sm:$0xff]
        %v273 = vld [vmem:[#allocation2 + $0x18] sm:$0xff]
        %v274 = vld [vmem:[#allocation2 + $0x20] sm:$0xff]
        %v275 = vld [vmem:[#allocation2 + $0x28] sm:$0xff]
        %v276 = vld [vmem:[#allocation2 + $0x30] sm:$0xff]
        %v277 = vld [vmem:[#allocation2 + $0x38] sm:$0xff]
        %v278 = vld [vmem:[#allocation2 + $0x40] sm:$0xff]
        %v279 = vld [vmem:[#allocation2 + $0x48] sm:$0xff]
        %v280 = vld [vmem:[#allocation2 + $0x50] sm:$0xff]
        %v281 = vld [vmem:[#allocation2 + $0x58] sm:$0xff]
        %v282 = vld [vmem:[#allocation2 + $0x60] sm:$0xff]
        %v283 = vld [vmem:[#allocation2 + $0x68] sm:$0xff]
        %v284 = vld [vmem:[#allocation2 + $0x70] sm:$0xff]
        %v285 = vld [vmem:[#allocation2 + $0x78] sm:$0xff]
        %v286 = vld [vmem:[%s209] sm:$0xff]
        %v287 = vld [vmem:[%s209 + $0x8] sm:$0xff]
        %v288 = vld [vmem:[%s209 + $0x10] sm:$0xff]
        %v289 = vld [vmem:[%s209 + $0x18] sm:$0xff]
        %v290 = vld [vmem:[%s209 + $0x20] sm:$0xff]
        %v291 = vld [vmem:[%s209 + $0x28] sm:$0xff]
        %v292 = vld [vmem:[%s209 + $0x30] sm:$0xff]
        %v293 = vld [vmem:[%s209 + $0x38] sm:$0xff]
        %v294 = vld [vmem:[%s209 + $0x40] sm:$0xff]
        %v295 = vld [vmem:[%s209 + $0x48] sm:$0xff]
        %v296 = vld [vmem:[%s209 + $0x50] sm:$0xff]
        %v297 = vld [vmem:[%s209 + $0x58] sm:$0xff]
        %v298 = vld [vmem:[%s209 + $0x60] sm:$0xff]
        %v299 = vld [vmem:[%s209 + $0x68] sm:$0xff]
        %v300 = vld [vmem:[%s209 + $0x70] sm:$0xff]
        %v301 = vld [vmem:[%s209 + $0x78] sm:$0xff]
        %v302 = vld [vmem:[%s209 + $0x80] sm:$0xff]
        %v303 = vld [vmem:[%s209 + $0x88] sm:$0xff]
        %v304 = vld [vmem:[%s209 + $0x90] sm:$0xff]
        %v305 = vld [vmem:[%s209 + $0x98] sm:$0xff]
        %v306 = vld [vmem:[%s209 + $0xa0] sm:$0xff]
        %v307 = vld [vmem:[%s209 + $0xa8] sm:$0xff]
        %v308 = vld [vmem:[%s209 + $0xb0] sm:$0xff]
        %v309 = vld [vmem:[%s209 + $0xb8] sm:$0xff]
        %v310 = vld [vmem:[%s209 + $0xc0] sm:$0xff]
        %v311 = vld [vmem:[%s209 + $0xc8] sm:$0xff]
        %v312 = vld [vmem:[%s209 + $0xd0] sm:$0xff]
        %v313 = vld [vmem:[%s209 + $0xd8] sm:$0xff]
        %v314 = vld [vmem:[%s209 + $0xe0] sm:$0xff]
        %v315 = vld [vmem:[%s209 + $0xe8] sm:$0xff]
        %v316 = vld [vmem:[%s209 + $0xf0] sm:$0xff]
        %v317 = vld [vmem:[%s209 + $0xf8] sm:$0xff]
        %v318 = vld [vmem:[%s218] sm:$0xff]
        %v319 = vld [vmem:[%s218 + $0x8] sm:$0xff]
        %v320 = vld [vmem:[%s218 + $0x10] sm:$0xff]
        %v321 = vld [vmem:[%s218 + $0x18] sm:$0xff]
        %v322 = vld [vmem:[%s218 + $0x20] sm:$0xff]
        %v323 = vld [vmem:[%s218 + $0x28] sm:$0xff]
        %v324 = vld [vmem:[%s218 + $0x30] sm:$0xff]
        %v325 = vld [vmem:[%s218 + $0x38] sm:$0xff]
        %v326 = vld [vmem:[%s218 + $0x40] sm:$0xff]
        %v327 = vld [vmem:[%s218 + $0x48] sm:$0xff]
        %v328 = vld [vmem:[%s218 + $0x50] sm:$0xff]
        %v329 = vld [vmem:[%s218 + $0x58] sm:$0xff]
        %v330 = vld [vmem:[%s218 + $0x60] sm:$0xff]
        %v331 = vld [vmem:[%s218 + $0x68] sm:$0xff]
        %v332 = vld [vmem:[%s218 + $0x70] sm:$0xff]
        %v333 = vld [vmem:[%s218 + $0x78] sm:$0xff]
        %v334 = vld [vmem:[%s218 + $0x80] sm:$0xff]
        %v335 = vld [vmem:[%s218 + $0x88] sm:$0xff]
        %v336 = vld [vmem:[%s218 + $0x90] sm:$0xff]
        %v337 = vld [vmem:[%s218 + $0x98] sm:$0xff]
        %v338 = vld [vmem:[%s218 + $0xa0] sm:$0xff]
        %v339 = vld [vmem:[%s218 + $0xa8] sm:$0xff]
        %v340 = vld [vmem:[%s218 + $0xb0] sm:$0xff]
        %v341 = vld [vmem:[%s218 + $0xb8] sm:$0xff]
        %v342 = vld [vmem:[%s218 + $0xc0] sm:$0xff]
        %v343 = vld [vmem:[%s218 + $0xc8] sm:$0xff]
        %v344 = vld [vmem:[%s218 + $0xd0] sm:$0xff]
        %v345 = vld [vmem:[%s218 + $0xd8] sm:$0xff]
        %v346 = vld [vmem:[%s218 + $0xe0] sm:$0xff]
        %v347 = vld [vmem:[%s218 + $0xe8] sm:$0xff]
        %v348 = vld [vmem:[%s218 + $0xf0] sm:$0xff]
        %v349 = vld [vmem:[%s218 + $0xf8] sm:$0xff]
        %350 = vmatprep.subr.mxu0 %v319
        %351 = vmatpush1.xpose.msra.mxu0 %v318
        %352 = vmatprep.subr.mxu0 %v321
        %353 = vmatpush1.xpose.msra.mxu0 %v320
        %354 = vmatprep.subr.mxu0 %v323
        %355 = vmatpush1.xpose.msra.mxu0 %v322
        %356 = vmatprep.subr.mxu0 %v325
        %357 = vmatpush1.xpose.msra.mxu0 %v324
        %358 = vmatprep.subr.mxu0 %v327
        %359 = vmatpush1.xpose.msra.mxu0 %v326
        %360 = vmatprep.subr.mxu0 %v329
        %361 = vmatpush1.xpose.msra.mxu0 %v328
        %362 = vmatprep.subr.mxu0 %v331
        %363 = vmatpush1.xpose.msra.mxu0 %v330
        %364 = vmatprep.subr.mxu0 %v333
        %365 = vmatpush1.xpose.msra.mxu0 %v332
        %366 = vmatprep.subr.mxu0 %v335
        %367 = vmatpush1.xpose.msra.mxu0 %v334
        %368 = vmatprep.subr.mxu0 %v337
        %369 = vmatpush1.xpose.msra.mxu0 %v336
        %370 = vmatprep.subr.mxu0 %v339
        %371 = vmatpush1.xpose.msra.mxu0 %v338
        %372 = vmatprep.subr.mxu0 %v341
        %373 = vmatpush1.xpose.msra.mxu0 %v340
        %374 = vmatprep.subr.mxu0 %v343
        %375 = vmatpush1.xpose.msra.mxu0 %v342
        %376 = vmatprep.subr.mxu0 %v345
        %377 = vmatpush1.xpose.msra.mxu0 %v344
        %378 = vmatprep.subr.mxu0 %v347
        %379 = vmatpush1.xpose.msra.mxu0 %v346
        %380 = vmatprep.subr.mxu0 %v349
        %381 = vmatpush1.xpose.msra.mxu0 %v348
        %382 = vmatprep.subr.mxu0 0.0
        %383 = vmatpush1.xpose.msra.mxu0 0.0
        %384 = vmatprep.subr.mxu0 0.0
        %385 = vmatpush1.xpose.msra.mxu0 0.0
        %386 = vmatprep.subr.mxu0 0.0
        %387 = vmatpush1.xpose.msra.mxu0 0.0
        %388 = vmatprep.subr.mxu0 0.0
        %389 = vmatpush1.xpose.msra.mxu0 0.0
        %390 = vmatprep.subr.mxu0 0.0
        %391 = vmatpush1.xpose.msra.mxu0 0.0
        %392 = vmatprep.subr.mxu0 0.0
        %393 = vmatpush1.xpose.msra.mxu0 0.0
        %394 = vmatprep.subr.mxu0 0.0
        %395 = vmatpush1.xpose.msra.mxu0 0.0
        %396 = vmatprep.subr.mxu0 0.0
        %397 = vmatpush1.xpose.msra.mxu0 0.0
        %398 = vmatprep.subr.mxu0 0.0
        %399 = vmatpush1.xpose.msra.mxu0 0.0
        %400 = vmatprep.subr.mxu0 0.0
        %401 = vmatpush1.xpose.msra.mxu0 0.0
        %402 = vmatprep.subr.mxu0 0.0
        %403 = vmatpush1.xpose.msra.mxu0 0.0
        %404 = vmatprep.subr.mxu0 0.0
        %405 = vmatpush1.xpose.msra.mxu0 0.0
        %406 = vmatprep.subr.mxu0 0.0
        %407 = vmatpush1.xpose.msra.mxu0 0.0
        %408 = vmatprep.subr.mxu0 0.0
        %409 = vmatpush1.xpose.msra.mxu0 0.0
        %410 = vmatprep.subr.mxu0 0.0
        %411 = vmatpush1.xpose.msra.mxu0 0.0
        %412 = vmatprep.subr.mxu0 0.0
        %413 = vmatpush1.xpose.msra.mxu0 0.0
        %414 = vmatprep.mubr.f32.mxu0 %v287
        %415 = vmatmul.mubr.f32.gmra.mrb[0].mxu0 %v286
        %v416 = vpop.f32.mrb[0].mxu0
        %v417 = vadd.f32 0.0, %v416
        %v418 = vpop.f32.mrb[0].mxu0
        %419 = vmatprep.mubr.f32.mxu0 %v289
        %420 = vmatmul.mubr.f32.gmra.mrb[0].mxu0 %v288
        %v421 = vpop.f32.mrb[0].mxu0
        %v422 = vadd.f32 0.0, %v421
        %v423 = vpop.f32.mrb[0].mxu0
        %424 = vmatprep.mubr.f32.mxu0 %v291
        %425 = vmatmul.mubr.f32.gmra.mrb[0].mxu0 %v290
        %v426 = vpop.f32.mrb[0].mxu0
        %v427 = vadd.f32 0.0, %v426
        %v428 = vpop.f32.mrb[0].mxu0
        %429 = vmatprep.mubr.f32.mxu0 %v293
        %430 = vmatmul.mubr.f32.gmra.mrb[0].mxu0 %v292
        %v431 = vpop.f32.mrb[0].mxu0
        %v432 = vadd.f32 0.0, %v431
        %v433 = vpop.f32.mrb[0].mxu0
        %434 = vmatprep.mubr.f32.mxu0 %v295
        %435 = vmatmul.mubr.f32.gmra.mrb[0].mxu0 %v294
        %v436 = vpop.f32.mrb[0].mxu0
        %v437 = vadd.f32 0.0, %v436
        %v438 = vpop.f32.mrb[0].mxu0
        %439 = vmatprep.mubr.f32.mxu0 %v297
        %440 = vmatmul.mubr.f32.gmra.mrb[0].mxu0 %v296
        %v441 = vpop.f32.mrb[0].mxu0
        %v442 = vadd.f32 0.0, %v441
        %v443 = vpop.f32.mrb[0].mxu0
        %444 = vmatprep.mubr.f32.mxu0 %v299
        %445 = vmatmul.mubr.f32.gmra.mrb[0].mxu0 %v298
        %v446 = vpop.f32.mrb[0].mxu0
        %v447 = vadd.f32 0.0, %v446
        %v448 = vpop.f32.mrb[0].mxu0
        %449 = vmatprep.mubr.f32.mxu0 %v301
        %450 = vmatmul.mubr.f32.gmra.mrb[0].mxu0 %v300
        %v451 = vpop.f32.mrb[0].mxu0
        %v452 = vadd.f32 0.0, %v451
        %v453 = vpop.f32.mrb[0].mxu0
        %454 = vmatprep.mubr.f32.mxu0 %v303
        %455 = vmatmul.mubr.f32.gmra.mrb[0].mxu0 %v302
        %v456 = vpop.f32.mrb[0].mxu0
        %v457 = vadd.f32 0.0, %v456
        %v458 = vpop.f32.mrb[0].mxu0
        %459 = vmatprep.mubr.f32.mxu0 %v305
        %460 = vmatmul.mubr.f32.gmra.mrb[0].mxu0 %v304
        %v461 = vpop.f32.mrb[0].mxu0
        %v462 = vadd.f32 0.0, %v461
        %v463 = vpop.f32.mrb[0].mxu0
        %464 = vmatprep.mubr.f32.mxu0 %v307
        %465 = vmatmul.mubr.f32.gmra.mrb[0].mxu0 %v306
        %v466 = vpop.f32.mrb[0].mxu0
        %v467 = vadd.f32 0.0, %v466
        %v468 = vpop.f32.mrb[0].mxu0
        %469 = vmatprep.mubr.f32.mxu0 %v309
        %470 = vmatmul.mubr.f32.gmra.mrb[0].mxu0 %v308
        %v471 = vpop.f32.mrb[0].mxu0
        %v472 = vadd.f32 0.0, %v471
        %v473 = vpop.f32.mrb[0].mxu0
        %474 = vmatprep.mubr.f32.mxu0 %v311
        %475 = vmatmul.mubr.f32.gmra.mrb[0].mxu0 %v310
        %v476 = vpop.f32.mrb[0].mxu0
        %v477 = vadd.f32 0.0, %v476
        %v478 = vpop.f32.mrb[0].mxu0
        %479 = vmatprep.mubr.f32.mxu0 %v313
        %480 = vmatmul.mubr.f32.gmra.mrb[0].mxu0 %v312
        %v481 = vpop.f32.mrb[0].mxu0
        %v482 = vadd.f32 0.0, %v481
        %v483 = vpop.f32.mrb[0].mxu0
        %484 = vmatprep.mubr.f32.mxu0 %v315
        %485 = vmatmul.mubr.f32.gmra.mrb[0].mxu0 %v314
        %v486 = vpop.f32.mrb[0].mxu0
        %v487 = vadd.f32 0.0, %v486
        %v488 = vpop.f32.mrb[0].mxu0
        %489 = vmatprep.mubr.f32.mxu0 %v317
        %490 = vmatmul.mubr.f32.gmra.mrb[0].mxu0 %v316
        %v491 = vpop.f32.mrb[0].mxu0
        %v492 = vadd.f32 0.0, %v491
        %v493 = vpop.f32.mrb[0].mxu0
        %494 = vdwg.mxu0
        %v495 = vadd.f32 %v270, %v417
        %v496 = vadd.f32 %v271, %v422
        %v497 = vadd.f32 %v272, %v427
        %v498 = vadd.f32 %v273, %v432
        %v499 = vadd.f32 %v274, %v437
        %v500 = vadd.f32 %v275, %v442
        %v501 = vadd.f32 %v276, %v447
        %v502 = vadd.f32 %v277, %v452
        %v503 = vadd.f32 %v278, %v457
        %v504 = vadd.f32 %v279, %v462
        %v505 = vadd.f32 %v280, %v467
        %v506 = vadd.f32 %v281, %v472
        %v507 = vadd.f32 %v282, %v477
        %v508 = vadd.f32 %v283, %v482
        %v509 = vadd.f32 %v284, %v487
        %v510 = vadd.f32 %v285, %v492
        %511 = vst [vmem:[#allocation2] sm:$0xff] %v495
        %512 = vst [vmem:[#allocation2 + $0x8] sm:$0xff] %v496
        %513 = vst [vmem:[#allocation2 + $0x10] sm:$0xff] %v497
        %514 = vst [vmem:[#allocation2 + $0x18] sm:$0xff] %v498
        %515 = vst [vmem:[#allocation2 + $0x20] sm:$0xff] %v499
        %516 = vst [vmem:[#allocation2 + $0x28] sm:$0xff] %v500
        %517 = vst [vmem:[#allocation2 + $0x30] sm:$0xff] %v501
        %518 = vst [vmem:[#allocation2 + $0x38] sm:$0xff] %v502
        %519 = vst [vmem:[#allocation2 + $0x40] sm:$0xff] %v503
        %520 = vst [vmem:[#allocation2 + $0x48] sm:$0xff] %v504
        %521 = vst [vmem:[#allocation2 + $0x50] sm:$0xff] %v505
        %522 = vst [vmem:[#allocation2 + $0x58] sm:$0xff] %v506
        %523 = vst [vmem:[#allocation2 + $0x60] sm:$0xff] %v507
        %524 = vst [vmem:[#allocation2 + $0x68] sm:$0xff] %v508
        %525 = vst [vmem:[#allocation2 + $0x70] sm:$0xff] %v509
        %526 = vst [vmem:[#allocation2 + $0x78] sm:$0xff] %v510
        %p527 = scmp.eq.s32.totalorder %s28, 1
        // Predicated region
        $region45: #{tpu_custom_call.1} parent=31 // pred_check
          %p528 = pneg %p527
        $region46: #{tpu_custom_call.1} parent=31 // pred_check_branch
          %530 = sbr.rel (%p528) target = $region48
        $region47: #{tpu_custom_call.1} parent=31 // pred_region
          %v531 = vld [vmem:[#allocation2] sm:$0xff]
          %v532 = vld [vmem:[#allocation2 + $0x8] sm:$0xff]
          %v533 = vld [vmem:[#allocation2 + $0x10] sm:$0xff]
          %v534 = vld [vmem:[#allocation2 + $0x18] sm:$0xff]
          %v535 = vld [vmem:[#allocation2 + $0x20] sm:$0xff]
          %v536 = vld [vmem:[#allocation2 + $0x28] sm:$0xff]
          %v537 = vld [vmem:[#allocation2 + $0x30] sm:$0xff]
          %v538 = vld [vmem:[#allocation2 + $0x38] sm:$0xff]
          %v539 = vld [vmem:[#allocation2 + $0x40] sm:$0xff]
          %v540 = vld [vmem:[#allocation2 + $0x48] sm:$0xff]
          %v541 = vld [vmem:[#allocation2 + $0x50] sm:$0xff]
          %v542 = vld [vmem:[#allocation2 + $0x58] sm:$0xff]
          %v543 = vld [vmem:[#allocation2 + $0x60] sm:$0xff]
          %v544 = vld [vmem:[#allocation2 + $0x68] sm:$0xff]
          %v545 = vld [vmem:[#allocation2 + $0x70] sm:$0xff]
          %v546 = vld [vmem:[#allocation2 + $0x78] sm:$0xff]
          %v547 = vld [vmem:[%s2] sm:$0x1]
          %v549 = vlaneseq
          %v550 = vshrl.u32 %v549, 7
          %v551 = vsub.s32 0, %v550
          %v552 = vrot.slane %v547, %v551
          %v554 = vadd.f32 %v531, %v552
          %v555 = vadd.f32 %v532, %v552
          %v556 = vadd.f32 %v533, %v552
          %v557 = vadd.f32 %v534, %v552
          %v558 = vadd.f32 %v535, %v552
          %v559 = vadd.f32 %v536, %v552
          %v560 = vadd.f32 %v537, %v552
          %v561 = vadd.f32 %v538, %v552
          %v562 = vadd.f32 %v539, %v552
          %v563 = vadd.f32 %v540, %v552
          %v564 = vadd.f32 %v541, %v552
          %v565 = vadd.f32 %v542, %v552
          %v566 = vadd.f32 %v543, %v552
          %v567 = vadd.f32 %v544, %v552
          %v568 = vadd.f32 %v545, %v552
          %v569 = vadd.f32 %v546, %v552
          %570 = vst [vmem:[%s245] sm:$0xff] %v554
          %571 = vst [vmem:[%s245 + $0x8] sm:$0xff] %v555
          %572 = vst [vmem:[%s245 + $0x10] sm:$0xff] %v556
          %573 = vst [vmem:[%s245 + $0x18] sm:$0xff] %v557
          %574 = vst [vmem:[%s245 + $0x20] sm:$0xff] %v558
          %575 = vst [vmem:[%s245 + $0x28] sm:$0xff] %v559
          %576 = vst [vmem:[%s245 + $0x30] sm:$0xff] %v560
          %577 = vst [vmem:[%s245 + $0x38] sm:$0xff] %v561
          %578 = vst [vmem:[%s245 + $0x40] sm:$0xff] %v562
          %579 = vst [vmem:[%s245 + $0x48] sm:$0xff] %v563
          %580 = vst [vmem:[%s245 + $0x50] sm:$0xff] %v564
          %581 = vst [vmem:[%s245 + $0x58] sm:$0xff] %v565
          %582 = vst [vmem:[%s245 + $0x60] sm:$0xff] %v566
          %583 = vst [vmem:[%s245 + $0x68] sm:$0xff] %v567
          %584 = vst [vmem:[%s245 + $0x70] sm:$0xff] %v568
          %585 = vst [vmem:[%s245 + $0x78] sm:$0xff] %v569
        $region48: #{tpu_custom_call.1} parent=31 // pred_fallthru
          _
        %s586 = sand.u32 %s118, 1
        %s587 = scalar_lea.sflag [#allocation5], %s586
        %s588 = sand.u32 %s118, 1
        %s589 = smul.addr %s588, 128
        %s590 = scalar_lea.vmem [#allocation8], %s589
        // Predicated region
        $region49: #{tpu_custom_call.1} parent=31 // pred_check
          %p591 = pneg %p128
        $region50: #{tpu_custom_call.1} parent=31 // pred_check_branch
          %593 = sbr.rel (%p591) target = $region52
        $region51: #{tpu_custom_call.1} parent=31 // pred_region
          %s594 = smul.u32 16, %s27
          %s596 = ssub.s32 2048, 2048
          %597 = vsyncadd %s587, %s596
          %s598 = smul.addr %s594, 128
          %s599 = scalar_lea.hbm %s3, %s598
          %s600 = sshll.u32 %s590, 4
          %s601 = int_to_ptr.vmem [resolvable:$true] %s600
          %606 = dma.vmem_to_hbm [thread:$0]  %s601, 2048, %s599, %s587, 128, 128, 8
        $region52: #{tpu_custom_call.1} parent=31 // pred_fallthru
          _
      $region32: #{tpu_custom_call.1} parent=5 // pred_fallthru
        _
      %p607 = scmp.le.s32.totalorder 2, %s18
      // Predicated region
      $region53: #{tpu_custom_call.1} parent=5 // pred_check
        %p608 = pneg %p607
      $region54: #{tpu_custom_call.1} parent=5 // pred_check_branch
        %610 = sbr.rel (%p608) target = $region56
      $region55: #{tpu_custom_call.1} parent=5 // pred_region
        %s611 = ssub.s32 %s18, 2
        // Predicated region
        $region57: #{tpu_custom_call.1} parent=55 // pred_check
          %p612 = pneg %p134
        $region58: #{tpu_custom_call.1} parent=55 // pred_check_branch
          %614 = sbr.rel (%p612) target = $region60
        $region59: #{tpu_custom_call.1} parent=55 // pred_region
          %s615 = sand.u32 %s119, 1
          %s616 = scalar_lea.sflag [#allocation5], %s615
          %s617 = sand.u32 %s119, 1
          %s618 = smul.addr %s617, 128
          %s619 = scalar_lea.vmem [#allocation8], %s618
          %620 = dma.done %s616, 2048
        $region60: #{tpu_custom_call.1} parent=55 // pred_fallthru
          _
      $region56: #{tpu_custom_call.1} parent=5 // pred_fallthru
        _
    $region6: #{tpu_custom_call.1} parent=1 // loop_footer
      %s22 = sadd.s32 1, %s18
    $region7: #{tpu_custom_call.1} parent=1 // loop_footer_branch
      %17 = sbr.rel target = $region3
    $region8: #{tpu_custom_call.1} parent=1 // loop_exit
      _
    %621 = vsyncpa [#allocation4], 1
    %s622 = scalar_lea.sflag [#allocation4], 1
    %623 = vsyncpa %s622, 1
    %624 = vsyncpa [#allocation7], 1
    %s625 = scalar_lea.sflag [#allocation7], 1
    %626 = vsyncpa %s625, 1
    %627 = vsyncpa [#allocation5], 1
    %s628 = scalar_lea.sflag [#allocation5], 1
    %629 = vsyncpa %s628, 1

</llo_original>
